<compile_context>
chip_gen: v7x
topology: tpu7x:2x2x1
jax: 0.10.0
libtpu: 0.0.40
codegen_flags: <defaults>
</compile_context>

<pallas_src>
import functools

import jax
import jax.numpy as jnp
from jax.experimental import pallas as pl
from jax.experimental.pallas import tpu as pltpu

DEFAULT_COEF = 0.97

# ~2 MiB blocks: in + halo + out, each double-buffered, stays well under the
# v5e 16 MiB and v7x 32 MiB scoped-VMEM defaults while amortizing step overhead.
_TARGET_BLOCK_BYTES = 2 << 20


def _pre_emphasis_kernel(x_ref, prev_ref, o_ref, *, coef, nw):
    """y[:, t] = x[:, t] - coef * x[:, t-1] with reflect padding at t == 0."""
    j = pl.program_id(1)                       # time-tile index (parallel)
    x = x_ref[...]                             # (b_tile, t_tile)

    # Bulk shifted-by-one via XLU roll (column 0 wraps; patched below).
    # NOTE: pltpu.roll needs a non-negative axis (axis=-1 is rejected).
    rolled = pltpu.roll(x, shift=1, axis=1)

    # Previous sample of this tile's first column:
    #   j == 0 : reflect padding  -> x[:, 1]
    #   j  > 0 : last column of the previous time tile (narrow halo block).
    boundary_prev = jnp.where(j == 0, x[:, 1:2], prev_ref[:, nw - 1:nw])

    lane = jax.lax.broadcasted_iota(jnp.int32, x.shape, dimension=1)
    prev_samples = jnp.where(lane == 0, boundary_prev, rolled)

    # Single unmasked lane-dense store (no second masked column-0 store, no WAW).
    o_ref[...] = x - coef * prev_samples


def _choose_tiles(B, T, itemsize):
    # Sublane packing is dtype dependent: f32 -> 8 rows/vreg, bf16 -> 16, int8/fp8 -> 32.
    sub = {4: 8, 2: 16, 1: 32}.get(itemsize, 8)
    if B <= sub:
        b_tile = B                              # full-extent sublane block is legal
    else:
        b_tile = min((B // sub) * sub, 128)
    if T < 128:
        t_tile = T                              # full-extent lane block is legal
    else:
        budget = max(128, _TARGET_BLOCK_BYTES // (b_tile * itemsize))
        t_tile = (min(T, budget) // 128) * 128  # lane-dense, multiple of 128
    return b_tile, t_tile


def pre_emphasis(x: jax.Array, coef: float = DEFAULT_COEF,
                 *, b_tile: int | None = None,
                 t_tile: int | None = None) -> jax.Array:
    """x: (B, T) waveform -> (B, T) pre-emphasized waveform."""
    B, T = x.shape
    if T < 2:
        raise ValueError("reflect padding requires T >= 2")
    itemsize = jnp.dtype(x.dtype).itemsize
    auto_b, auto_t = _choose_tiles(B, T, itemsize)
    b_tile = auto_b if b_tile is None else b_tile
    t_tile = auto_t if t_tile is None else t_tile
    if t_tile < T and t_tile % 128 != 0:
        raise ValueError("t_tile must be a multiple of 128 (or cover all of T)")
    t_tile = min(t_tile, T)

    nw = min(128, t_tile)          # halo block width (last columns of tile j-1)
    stride = t_tile // nw          # t_tile measured in nw-wide blocks
    grid = (pl.cdiv(B, b_tile), pl.cdiv(T, t_tile))
    nbytes = x.size * itemsize

    kernel = functools.partial(_pre_emphasis_kernel, coef=coef, nw=nw)
    return pl.pallas_call(
        kernel,
        out_shape=jax.ShapeDtypeStruct((B, T), x.dtype),
        grid=grid,
        in_specs=[
            # Main tile of x.
            pl.BlockSpec((b_tile, t_tile), lambda i, j: (i, j)),
            # Narrow halo on x: last nw columns of time tile j-1 (clamped at 0;
            # unused when j == 0 because the reflect path is taken instead).
            pl.BlockSpec((b_tile, nw),
                         lambda i, j: (i, jnp.maximum(j * stride - 1, 0))),
        ],
        out_specs=pl.BlockSpec((b_tile, t_tile), lambda i, j: (i, j)),
        compiler_params=pltpu.CompilerParams(
            # Carry-free -> both axes are independent; lets v7x megacore shard
            # the T sweep even when B fits in a single sublane block.
            dimension_semantics=("parallel", "parallel"),
        ),
        cost_estimate=pl.CostEstimate(
            flops=2 * x.size, transcendentals=0,
            bytes_accessed=2 * nbytes + nbytes // max(1, stride)),
    )(x, x)


def pre_emphasis_ref(x: jax.Array, coef: float = DEFAULT_COEF) -> jax.Array:
    """Pure-JAX reference mirroring F.pad(reflect) + conv1d([-coef, 1])."""
    padded = jnp.concatenate([x[:, 1:2], x], axis=1)   # reflect-pad left by 1
    return padded[:, 1:] - coef * padded[:, :-1]


if __name__ == "__main__":
    key = jax.random.PRNGKey(0)
    B, T = 4, 512
    x = jax.random.normal(key, (B, T), dtype=jnp.float32)

    # Auto tiling (single time tile at this size -> reflect path).
    y_auto = pre_emphasis(x)
    # Forced small time tiles -> exercises the cross-tile halo path.
    y_tiled = pre_emphasis(x, t_tile=128)
    jax.block_until_ready((y_auto, y_tiled))

    y_ref = pre_emphasis_ref(x)
    assert y_auto.shape == (B, T)
    assert jnp.allclose(y_auto, y_ref, atol=1e-5, rtol=1e-5)
    assert jnp.allclose(y_tiled, y_ref, atol=1e-5, rtol=1e-5)

    print("KERNEL_OK")
</pallas_src>

<mosaic_0001>
module attributes {stable_mosaic.version = 11 : i64} {
  func.func @_pre_emphasis_kernel(%arg0: i32, %arg1: i32, %arg2: memref<4x512xf32, #tpu.memory_space<vmem>>, %arg3: memref<4x128xf32, #tpu.memory_space<vmem>>, %arg4: memref<4x512xf32, #tpu.memory_space<vmem>>) attributes {dimension_semantics = [#tpu.dimension_semantics<parallel>, #tpu.dimension_semantics<parallel>], iteration_bounds = array<i64: 1, 1>, scalar_prefetch = 0 : i64, scratch_operands = 0 : i64, tpu.core_type = #tpu.core_type<tc>, window_params = [{transform_indices = @transform_0, window_bounds = array<i64: 4, 512>}, {transform_indices = @transform_1, window_bounds = array<i64: 4, 128>}, {transform_indices = @transform_2, window_bounds = array<i64: 4, 512>}]} {
    %c0 = arith.constant 0 : index
    %c0_0 = arith.constant 0 : index
    %0 = vector.load %arg2[%c0, %c0_0] : memref<4x512xf32, #tpu.memory_space<vmem>>, vector<4x512xf32>
    %c1_i32 = arith.constant 1 : i32
    %1 = tpu.dynamic_rotate %0 by %c1_i32 dim 1 : vector<4x512xf32>, i32 -> vector<4x512xf32>
    %c0_i32 = arith.constant 0 : i32
    %2 = arith.cmpi eq, %arg1, %c0_i32 : i32
    %3 = vector.extract_strided_slice %0 {offsets = [0, 1], sizes = [4, 1], strides = [1, 1]} : vector<4x512xf32> to vector<4x1xf32>
    %c0_1 = arith.constant 0 : index
    %c127 = arith.constant 127 : index
    %4 = vector.load %arg3[%c0_1, %c127] : memref<4x128xf32, #tpu.memory_space<vmem>>, vector<4x1xf32>
    %5 = arith.select %2, %3, %4 : vector<4x1xf32>
    %6 = tpu.iota {dimensions = array<i32: 1>} : vector<4x512xi32>
    %c0_i32_2 = arith.constant 0 : i32
    %7 = vector.broadcast %c0_i32_2 : i32 to vector<4x512xi32>
    %8 = arith.cmpi eq, %6, %7 : vector<4x512xi32>
    %9 = vector.shape_cast %5 : vector<4x1xf32> to vector<4x1xf32>
    %10 = vector.broadcast %9 : vector<4x1xf32> to vector<4x512xf32>
    %11 = arith.select %8, %10, %1 : vector<4x512xi1>, vector<4x512xf32>
    %cst = arith.constant 9.700000e-01 : f32
    %12 = vector.broadcast %cst : f32 to vector<4x512xf32>
    %13 = arith.mulf %12, %11 : vector<4x512xf32>
    %14 = arith.subf %0, %13 : vector<4x512xf32>
    %c0_3 = arith.constant 0 : index
    %c0_4 = arith.constant 0 : index
    %15 = vector.load %arg4[%c0_3, %c0_4] : memref<4x512xf32, #tpu.memory_space<vmem>>, vector<4x512xf32>
    tpu.vector_store %arg4[%c0_3, %c0_4], %14 {strides = array<i32>} : memref<4x512xf32, #tpu.memory_space<vmem>>, vector<4x512xf32>,
    return
  }
  func.func @transform_0(%arg0: i32, %arg1: i32) -> (i32, i32) {
    %c0_i32 = arith.constant 0 : i32
    return %arg0, %arg1 : i32, i32
  }
  func.func @transform_1(%arg0: i32, %arg1: i32) -> (i32, i32) {
    %c4_i32 = arith.constant 4 : i32
    %0 = arith.muli %arg1, %c4_i32 : i32
    %c1_i32 = arith.constant 1 : i32
    %1 = arith.subi %0, %c1_i32 : i32
    %c0_i32 = arith.constant 0 : i32
    %2 = arith.maxsi %1, %c0_i32 : i32
    %c0_i32_0 = arith.constant 0 : i32
    return %arg0, %2 : i32, i32
  }
  func.func @transform_2(%arg0: i32, %arg1: i32) -> (i32, i32) {
    %c0_i32 = arith.constant 0 : i32
    return %arg0, %arg1 : i32, i32
  }
}

</mosaic_0001>

<llo_original>
// kernel: tpu_custom_call.1
$region0: #{tpu_custom_call.1}
  #allocation0 [shape = 'u32[]', space=smem, size = 0x4, offset = 0x4, fixed_abs, tag = 'smem constant byte address 0x4 - core index']
  #allocation1 [shape = 'u32[144,128]{1,0:T(1,128)}', space=vmem, size = 0x12000, scoped, tag = 'internal scratch']
  %s0 = inlined_call_operand.hbm [shape: f32[4,512], index: 0, kind: input, shape index: {}]
  %s1 = inlined_call_operand.hbm [shape: f32[4,512], index: 1, kind: input, shape index: {}]
  %s2 = inlined_call_operand.hbm [shape: f32[4,512], index: 2, kind: output, shape index: {}]
  %s3 = sld [smem:[#allocation0]]
  $region26: #{tpu_custom_call.1} parent=0
    _
  %s5 = ssub.s32 1, %s3
  %s6 = scalar_select 0, %s5, %s3
  $region1: #{tpu_custom_call.1} parent=0
    #allocation2 [shape = 'u8[8192]{0}', space=vmem, size = 0x2000, scoped, tag = 'input window, operand 0, single buffered']
    #allocation3 [shape = 's32[1]{0}', space=sflag, size = 0x4, scoped, tag = 'scoped memory for tpu_custom_call.1']
    #allocation4 [shape = 's32[1]{0}', space=sflag, size = 0x4, scoped, tag = 'scoped memory for tpu_custom_call.1']
    #allocation5 [shape = 'u8[2048]{0}', space=vmem, size = 0x800, scoped, tag = 'input window, operand 1, single buffered']
    #allocation6 [shape = 's32[1]{0}', space=sflag, size = 0x4, scoped, tag = 'scoped memory for tpu_custom_call.1']
    #allocation7 [shape = 'u8[8192]{0}', space=vmem, size = 0x2000, scoped, tag = 'output window, operand 0, single buffered']
    %7 = vsyncpa [#allocation3], 0
    %8 = vsyncpa [#allocation6], 0
    %9 = vsyncpa [#allocation4], 0
    // Predicated region
    $region2: #{tpu_custom_call.1} parent=1 // pred_check
      _
    $region3: #{tpu_custom_call.1} parent=1 // pred_check_branch
      %11 = sbr.rel (0) target = $region5
    $region4: #{tpu_custom_call.1} parent=1 // pred_region
      %s13 = ssub.s32 256, 256
      %14 = vsyncadd [#allocation3], %s13
      %s16 = sshll.u32 [#allocation2], 4
      %s17 = int_to_ptr.vmem [resolvable:$true] %s16
      %19 = dma.hbm_to_vmem [thread:$0]  %s0, 256, %s17, [#allocation3]
    $region5: #{tpu_custom_call.1} parent=1 // pred_fallthru
      _
    // Predicated region
    $region6: #{tpu_custom_call.1} parent=1 // pred_check
      _
    $region7: #{tpu_custom_call.1} parent=1 // pred_check_branch
      %21 = sbr.rel (0) target = $region9
    $region8: #{tpu_custom_call.1} parent=1 // pred_region
      %s22 = smul.u32 0, 4
      %s23 = ssub.s32 %s22, 1
      %p24 = scmp.gt.s32.totalorder %s23, 0
      %s25 = scalar_select %p24, %s23, 0
      %s27 = ssub.s32 64, 64
      %28 = vsyncadd [#allocation6], %s27
      %s29 = smul.addr %s25, 64
      %s30 = scalar_lea.hbm %s1, %s29
      %s32 = sshll.u32 [#allocation5], 4
      %s33 = int_to_ptr.vmem [resolvable:$true] %s32
      %35 = dma.hbm_to_vmem [thread:$0]  %s30, 64, %s33, [#allocation6]
    $region9: #{tpu_custom_call.1} parent=1 // pred_fallthru
      _
    // Predicated region
    $region10: #{tpu_custom_call.1} parent=1 // pred_check
      _
    $region11: #{tpu_custom_call.1} parent=1 // pred_check_branch
      %37 = sbr.rel (0) target = $region13
    $region12: #{tpu_custom_call.1} parent=1 // pred_region
      %38 = dma.done [#allocation3], 256
    $region13: #{tpu_custom_call.1} parent=1 // pred_fallthru
      _
    // Predicated region
    $region14: #{tpu_custom_call.1} parent=1 // pred_check
      _
    $region15: #{tpu_custom_call.1} parent=1 // pred_check_branch
      %40 = sbr.rel (0) target = $region17
    $region16: #{tpu_custom_call.1} parent=1 // pred_region
      %41 = dma.done [#allocation6], 64
    $region17: #{tpu_custom_call.1} parent=1 // pred_fallthru
      _
    %s42 = smul.u32 0, 4
    %s43 = ssub.s32 %s42, 1
    %p44 = scmp.gt.s32.totalorder %s43, 0
    %s45 = scalar_select %p44, %s43, 0
    %v46 = vld [vmem:[#allocation2] sm:$0xff]
    %v47 = vld [vmem:[#allocation2 + $0x8] sm:$0xff]
    %v50 = vcombine.high %v46, %v46
    %v51 = vcombine.high %v47, %v47
    %54 = vrot.lane.b32.xlu0 %v46, 1
    %v55 = vpop.permute.xlu0 %54
    %56 = vrot.lane.b32.xlu0 %v50, 1
    %v57 = vpop.permute.xlu0 %56
    %58 = vrot.lane.b32.xlu0 %v47, 1
    %v59 = vpop.permute.xlu0 %58
    %60 = vrot.lane.b32.xlu0 %v51, 1
    %v61 = vpop.permute.xlu0 %60
    %v62 = vlaneseq
    %v63 = vand.u32 %v62, 127
    %vm64 = vcmp.lt.s32.totalorder %v63, 1
    %v65 = vsel %vm64, %v59, %v61
    %v66 = vsel %vm64, %v57, %v59
    %v67 = vsel %vm64, %v55, %v57
    %v68 = vsel %vm64, %v61, %v55
    %p69 = scmp.eq.s32.totalorder 0, 0
    %v70 = vld [vmem:[#allocation5] sm:$0xf]
    %s71 = scalar_select %p69, 1, 0
    %v72 = vstv %s71
    %vm73 = vcmp.eq.s32.totalorder %v72, 1
    %75 = vrot.lane.b32.xlu0 %v70, 2
    %v76 = vpop.permute.xlu0 %75
    %v78 = vsel %vm73, %v46, %v76
    %v79 = vadd.s32 %v63, 128
    %v80 = vadd.s32 %v63, 256
    %v81 = vadd.s32 %v63, 384
    %vm82 = vcmp.eq.s32.totalorder %v63, 0
    %vm83 = vcmp.eq.s32.totalorder %v79, 0
    %vm84 = vcmp.eq.s32.totalorder %v80, 0
    %vm85 = vcmp.eq.s32.totalorder %v81, 0
    %87 = vset.pattern.permute.xlu0 1
    %88 = vperm.xlu0 %87, %v78
    %v89 = vpop.permute.xlu0 %88
    %v92 = vunpack.c.l.s4 839922192
    %v93 = vunpack.c.0.s8 %v92
    %v94 = vlaneseq
    %v95 = vshrl.u32 %v94, 7
    %v96 = vsub.s32 %v93, %v95
    %v97 = vrot.slane %v89, %v96
    %v99 = vcombine.high %v97, %v97
    %v101 = vsel %vm82, %v97, %v68
    %v102 = vsel %vm83, %v99, %v67
    %v103 = vsel %vm84, %v97, %v66
    %v104 = vsel %vm85, %v99, %v65
    %v105 = vmul.f32 %v101, 0.97
    %v106 = vmul.f32 %v102, 0.97
    %v107 = vmul.f32 %v103, 0.97
    %v108 = vmul.f32 %v104, 0.97
    %v113 = vcombine.low %v105, %v106
    %v114 = vcombine.low %v107, %v108
    %v117 = vsub.f32 %v46, %v113
    %v118 = vsub.f32 %v47, %v114
    %119 = vst [vmem:[#allocation7] sm:$0xff] %v117
    %120 = vst [vmem:[#allocation7 + $0x8] sm:$0xff] %v118
    // Predicated region
    $region18: #{tpu_custom_call.1} parent=1 // pred_check
      _
    $region19: #{tpu_custom_call.1} parent=1 // pred_check_branch
      %122 = sbr.rel (0) target = $region21
    $region20: #{tpu_custom_call.1} parent=1 // pred_region
      %s124 = ssub.s32 256, 256
      %125 = vsyncadd [#allocation4], %s124
      %s127 = sshll.u32 [#allocation7], 4
      %s128 = int_to_ptr.vmem [resolvable:$true] %s127
      %130 = dma.vmem_to_hbm [thread:$0]  %s128, 256, %s2, [#allocation4]
    $region21: #{tpu_custom_call.1} parent=1 // pred_fallthru
      _
    // Predicated region
    $region22: #{tpu_custom_call.1} parent=1 // pred_check
      _
    $region23: #{tpu_custom_call.1} parent=1 // pred_check_branch
      %132 = sbr.rel (0) target = $region25
    $region24: #{tpu_custom_call.1} parent=1 // pred_region
      %133 = dma.done [#allocation4], 256
    $region25: #{tpu_custom_call.1} parent=1 // pred_fallthru
      _
    %134 = vsyncpa [#allocation3], 1
    %135 = vsyncpa [#allocation6], 1
    %136 = vsyncpa [#allocation4], 1

</llo_original>
